<compile_context>
chip_gen: v7x
topology: tpu7x:2x2x1
jax: 0.10.0
libtpu: 0.0.40
codegen_flags: <defaults>
</compile_context>

<pallas_src>
import functools

import jax
import jax.numpy as jnp
from jax.experimental import pallas as pl
from jax.experimental.pallas import tpu as pltpu

_LANES = 128
_MIN_GRID_STEPS = 4            # >=2 for v7x megacore, >=3-4 for DMA/compute overlap
_SINGLE_BLOCK_BYTES = 256 * 1024  # below this, one block: per-step cost dominates


# --------------------------------------------------------------------------
# Kernels (elementwise; tanh uses the EUP slot, the optional scale one VPU mul)
# --------------------------------------------------------------------------
def _tanh_kernel(x_ref, o_ref, *, scale):
    x = x_ref[...]
    y = jnp.tanh(x) if scale == 1.0 else jnp.tanh(scale * x)
    o_ref[...] = y.astype(o_ref.dtype)


def _sign_kernel(x_ref, o_ref):
    # jnp.sign(0) == 0, matching torch.sign(0).
    o_ref[...] = jnp.sign(x_ref[...]).astype(o_ref.dtype)


# --------------------------------------------------------------------------
# Tiling helpers
# --------------------------------------------------------------------------
@functools.lru_cache(maxsize=None)
def _max_block_bytes():
    """Per-generation cap on the per-step block size (bytes)."""
    try:
        kind = jax.devices()[0].device_kind.lower()
    except Exception:  # pragma: no cover - defensive
        return 2 * 1024 * 1024
    if ("v6" in kind) or ("v7" in kind) or ("7x" in kind):
        # v6e/v7x: 4 MiB blocks -> 16 MiB double-buffered in+out, under the
        # 32 MiB scoped-VMEM default.  (pl.Buffered(3) is a possible further
        # sweep on v7x; not enabled by default.)
        return 4 * 1024 * 1024
    # v5e (16 MiB scoped-VMEM default) and anything unrecognized: 2 MiB blocks.
    return 2 * 1024 * 1024


def _pick_tile_rows(rows, itemsize):
    """Pick a row-tile that keeps >=_MIN_GRID_STEPS steps for non-tiny arrays."""
    row_bytes = _LANES * itemsize
    if rows * row_bytes <= _SINGLE_BLOCK_BYTES or rows <= 8:
        # Tiny: one block covering the whole array (always a legal block shape).
        return rows
    max_tile_rows = max(8, (_max_block_bytes() // row_bytes) // 8 * 8)
    tile = pl.cdiv(rows, _MIN_GRID_STEPS)
    tile = ((tile + 7) // 8) * 8          # sublane multiple
    return max(8, min(tile, max_tile_rows))


def _run_elementwise(x2d, kernel, *, transcendental):
    rows, lanes = x2d.shape
    itemsize = x2d.dtype.itemsize
    tile_rows = _pick_tile_rows(rows, itemsize)
    grid = (pl.cdiv(rows, tile_rows),)
    n = rows * lanes

    block = pl.BlockSpec((tile_rows, lanes), lambda i: (i, 0))
    cost = pl.CostEstimate(
        flops=n,
        transcendentals=n if transcendental else 0,
        bytes_accessed=2 * n * itemsize,
    )
    return pl.pallas_call(
        kernel,
        out_shape=jax.ShapeDtypeStruct((rows, lanes), x2d.dtype),
        grid=grid,
        in_specs=[block],
        out_specs=block,
        compiler_params=pltpu.CompilerParams(
            dimension_semantics=("parallel",)),
        cost_estimate=cost,
    )(x2d)


# --------------------------------------------------------------------------
# Public wrapper
# --------------------------------------------------------------------------
def self_tanh(x, epoch=0, is_training=True):
    """Pallas implementation of SelfTanh.forward (SelfBinarize).

    `epoch` must be a concrete Python number (as in the torch module, where it
    is a plain attribute); the resulting scale is baked in at trace time.
    """
    orig_shape = x.shape

    if is_training:
        scale = float(int(epoch / 40) * 20 + 1)
        kernel = functools.partial(_tanh_kernel, scale=scale)
        if scale == 1.0:
            jnp_fn = jnp.tanh
        else:
            jnp_fn = lambda v: jnp.tanh(scale * v)  # noqa: E731
        transcendental = True
    else:
        kernel = _sign_kernel
        jnp_fn = jnp.sign
        transcendental = False

    flat = x.reshape(-1)                 # contiguous -> free bitcast
    n = flat.shape[0]
    rem = n % _LANES
    n_main = n - rem

    if n_main == 0:
        # <128 elements: a kernel launch is pure overhead.
        return jnp_fn(flat).reshape(orig_shape)

    if rem == 0:
        # Common case: fully aligned, zero extra HBM traffic.
        x2d = flat.reshape(-1, _LANES)
        out2d = _run_elementwise(x2d, kernel, transcendental=transcendental)
        return out2d.reshape(orig_shape)

    # Unaligned: Pallas on the aligned prefix, trivial jnp op on the <128-elem
    # tail (avoids the pad + un-pad slice pair of full-array HBM passes).
    x2d = flat[:n_main].reshape(-1, _LANES)
    out_main = _run_elementwise(x2d, kernel, transcendental=transcendental)
    out_tail = jnp_fn(flat[n_main:])
    out = jnp.concatenate([out_main.reshape(-1), out_tail])
    return out.reshape(orig_shape)


# --------------------------------------------------------------------------
# Self-test
# --------------------------------------------------------------------------
if __name__ == "__main__":
    key = jax.random.PRNGKey(0)
    x = jax.random.normal(key, (2, 4, 16, 16), dtype=jnp.float32)  # NCHW

    # training path (module defaults: is_training=True, epoch=0) -> tanh(1 * x)
    y_train = self_tanh(x, epoch=0, is_training=True)
    jax.block_until_ready(y_train)
    assert y_train.shape == x.shape and y_train.dtype == x.dtype
    assert jnp.allclose(y_train, jnp.tanh(x), atol=1e-5)

    # later epoch: scale = int(85/40)*20 + 1 = 41
    y_ep = self_tanh(x, epoch=85, is_training=True)
    jax.block_until_ready(y_ep)
    assert jnp.allclose(y_ep, jnp.tanh(41.0 * x), atol=1e-5)

    # inference path -> sign(x)
    y_eval = self_tanh(x, is_training=False)
    jax.block_until_ready(y_eval)
    assert jnp.allclose(y_eval, jnp.sign(x))

    # unaligned n (> 128): exercises aligned-prefix kernel + jnp-tail path
    x_odd = jax.random.normal(jax.random.PRNGKey(1), (3, 5, 17), dtype=jnp.float32)
    y_odd = self_tanh(x_odd, epoch=0, is_training=True)
    jax.block_until_ready(y_odd)
    assert y_odd.shape == x_odd.shape
    assert jnp.allclose(y_odd, jnp.tanh(x_odd), atol=1e-5)

    # tiny (< 128 elements): pure-jnp fallback
    x_tiny = jax.random.normal(jax.random.PRNGKey(2), (3, 5, 7), dtype=jnp.float32)
    y_tiny = self_tanh(x_tiny, epoch=0, is_training=True)
    jax.block_until_ready(y_tiny)
    assert jnp.allclose(y_tiny, jnp.tanh(x_tiny), atol=1e-5)

    # larger aligned input: exercises the multi-step grid / pipelining path
    x_big = jax.random.normal(jax.random.PRNGKey(3), (8, 64, 32, 32), dtype=jnp.float32)
    y_big = self_tanh(x_big, epoch=120, is_training=True)  # scale = 61
    jax.block_until_ready(y_big)
    assert jnp.allclose(y_big, jnp.tanh(61.0 * x_big), atol=1e-5)

    print("KERNEL_OK")
</pallas_src>

<mosaic_0001>
module attributes {stable_mosaic.version = 11 : i64} {
  func.func @_tanh_kernel(%arg0: i32, %arg1: memref<16x128xf32, #tpu.memory_space<vmem>>, %arg2: memref<16x128xf32, #tpu.memory_space<vmem>>) attributes {dimension_semantics = [#tpu.dimension_semantics<parallel>], iteration_bounds = array<i64: 1>, scalar_prefetch = 0 : i64, scratch_operands = 0 : i64, tpu.core_type = #tpu.core_type<tc>, window_params = [{transform_indices = @transform_0, window_bounds = array<i64: 16, 128>}, {transform_indices = @transform_1, window_bounds = array<i64: 16, 128>}]} {
    %c0 = arith.constant 0 : index
    %c0_0 = arith.constant 0 : index
    %0 = vector.load %arg1[%c0, %c0_0] : memref<16x128xf32, #tpu.memory_space<vmem>>, vector<16x128xf32>
    %1 = math.tanh %0 : vector<16x128xf32>
    %c0_1 = arith.constant 0 : index
    %c0_2 = arith.constant 0 : index
    %2 = vector.load %arg2[%c0_1, %c0_2] : memref<16x128xf32, #tpu.memory_space<vmem>>, vector<16x128xf32>
    tpu.vector_store %arg2[%c0_1, %c0_2], %1 {strides = array<i32>} : memref<16x128xf32, #tpu.memory_space<vmem>>, vector<16x128xf32>,
    return
  }
  func.func @transform_0(%arg0: i32) -> (i32, i32) {
    %c0_i32 = arith.constant 0 : i32
    %c0_i32_0 = arith.constant 0 : i32
    return %arg0, %c0_i32 : i32, i32
  }
  func.func @transform_1(%arg0: i32) -> (i32, i32) {
    %c0_i32 = arith.constant 0 : i32
    %c0_i32_0 = arith.constant 0 : i32
    return %arg0, %c0_i32 : i32, i32
  }
}

</mosaic_0001>

<llo_original>
// kernel: tpu_custom_call.1
$region0: #{tpu_custom_call.1}
  #allocation0 [shape = 'u32[]', space=smem, size = 0x4, offset = 0x4, fixed_abs, tag = 'smem constant byte address 0x4 - core index']
  #allocation1 [shape = 'u32[144,128]{1,0:T(1,128)}', space=vmem, size = 0x12000, scoped, tag = 'internal scratch']
  %s0 = inlined_call_operand.hbm [shape: f32[16,128], index: 0, kind: input, shape index: {}]
  %s1 = inlined_call_operand.hbm [shape: f32[16,128], index: 1, kind: output, shape index: {}]
  %s2 = sld [smem:[#allocation0]]
  $region18: #{tpu_custom_call.1} parent=0
    _
  %s4 = ssub.s32 1, %s2
  %s5 = scalar_select 0, %s4, %s2
  $region1: #{tpu_custom_call.1} parent=0
    #allocation2 [shape = 'u8[8192]{0}', space=vmem, size = 0x2000, scoped, tag = 'input window, operand 0, single buffered']
    #allocation3 [shape = 's32[1]{0}', space=sflag, size = 0x4, scoped, tag = 'scoped memory for tpu_custom_call.1']
    #allocation4 [shape = 's32[1]{0}', space=sflag, size = 0x4, scoped, tag = 'scoped memory for tpu_custom_call.1']
    #allocation5 [shape = 'u8[8192]{0}', space=vmem, size = 0x2000, scoped, tag = 'output window, operand 0, single buffered']
    %6 = vsyncpa [#allocation3], 0
    %7 = vsyncpa [#allocation4], 0
    // Predicated region
    $region2: #{tpu_custom_call.1} parent=1 // pred_check
      _
    $region3: #{tpu_custom_call.1} parent=1 // pred_check_branch
      %9 = sbr.rel (0) target = $region5
    $region4: #{tpu_custom_call.1} parent=1 // pred_region
      %s11 = ssub.s32 256, 256
      %12 = vsyncadd [#allocation3], %s11
      %s13 = sshll.u32 [#allocation2], 4
      %s14 = int_to_ptr.vmem [resolvable:$true] %s13
      %19 = dma.hbm_to_vmem [thread:$0]  %s0, 256, %s14, [#allocation3], 128, 128, 8
    $region5: #{tpu_custom_call.1} parent=1 // pred_fallthru
      _
    // Predicated region
    $region6: #{tpu_custom_call.1} parent=1 // pred_check
      _
    $region7: #{tpu_custom_call.1} parent=1 // pred_check_branch
      %21 = sbr.rel (0) target = $region9
    $region8: #{tpu_custom_call.1} parent=1 // pred_region
      %22 = dma.done [#allocation3], 256
    $region9: #{tpu_custom_call.1} parent=1 // pred_fallthru
      _
    %v23 = vld [vmem:[#allocation2] sm:$0xff]
    %v24 = vld [vmem:[#allocation2 + $0x8] sm:$0xff]
    %v25 = vtanh.pop %v23
    %v26 = vtanh.pop %v24
    %27 = vst [vmem:[#allocation5] sm:$0xff] %v25
    %28 = vst [vmem:[#allocation5 + $0x8] sm:$0xff] %v26
    // Predicated region
    $region10: #{tpu_custom_call.1} parent=1 // pred_check
      _
    $region11: #{tpu_custom_call.1} parent=1 // pred_check_branch
      %30 = sbr.rel (0) target = $region13
    $region12: #{tpu_custom_call.1} parent=1 // pred_region
      %s32 = ssub.s32 256, 256
      %33 = vsyncadd [#allocation4], %s32
      %s34 = sshll.u32 [#allocation5], 4
      %s35 = int_to_ptr.vmem [resolvable:$true] %s34
      %40 = dma.vmem_to_hbm [thread:$0]  %s35, 256, %s1, [#allocation4], 128, 128, 8
    $region13: #{tpu_custom_call.1} parent=1 // pred_fallthru
      _
    // Predicated region
    $region14: #{tpu_custom_call.1} parent=1 // pred_check
      _
    $region15: #{tpu_custom_call.1} parent=1 // pred_check_branch
      %42 = sbr.rel (0) target = $region17
    $region16: #{tpu_custom_call.1} parent=1 // pred_region
      %43 = dma.done [#allocation4], 256
    $region17: #{tpu_custom_call.1} parent=1 // pred_fallthru
      _
    %44 = vsyncpa [#allocation3], 1
    %45 = vsyncpa [#allocation4], 1

</llo_original>
